<compile_context>
chip_gen: v6e
topology: v6e:2x2x1
jax: 0.10.0
libtpu: 0.0.40
codegen_flags: <defaults>
</compile_context>

<pallas_src>
import jax
import jax.numpy as jnp
from jax.experimental import pallas as pl
from jax.experimental.pallas import tpu as pltpu


def _copy_kernel(x_ref, o_ref):
    # Identity copy of the current (tr, cols) tile.
    o_ref[...] = x_ref[...]


def _resolve_shape(total, shape):
    """Resolve a torch-style view shape (with at most one -1)."""
    shape = list(shape)
    neg = [i for i, s in enumerate(shape) if s == -1]
    if len(neg) > 1:
        raise ValueError("only one -1 allowed in view shape")
    if neg:
        known = 1
        for i, s in enumerate(shape):
            if i != neg[0]:
                known *= s
        if known == 0 or total % known != 0:
            raise ValueError("shape incompatible with input size")
        shape[neg[0]] = total // known
    prod = 1
    for s in shape:
        prod *= s
    if prod != total:
        raise ValueError("shape incompatible with input size")
    return tuple(shape)


def _fold_and_tile(total, itemsize):
    """Pick a lane-dense (rows, cols) folding and a row tile for the copy."""
    # Packed-sublane multiple: 8 for 32-bit, 16 for bf16/fp16, 32 for int8/fp8.
    sub_mult = 8 * max(1, 4 // itemsize)

    # Widen the lane dim beyond 128 while it still divides the size and keeps
    # rows a multiple of the packed sublane count (unmasked full-vreg stores).
    cols = 128
    max_cols = 2048
    while (cols * 2 <= max_cols
           and total % (cols * 2) == 0
           and (total // (cols * 2)) % sub_mult == 0):
        cols *= 2
    rows = total // cols

    # Row tile: ~1 MiB per block (x2 buffers x in+out ~= 4 MiB VMEM), rounded
    # to the packed sublane multiple.  If rows isn't sublane-aligned, a single
    # full-rows block (legal: equals the array dim) is used instead.
    if rows % sub_mult == 0:
        target_block_bytes = 1 << 20
        tr = max(sub_mult, (target_block_bytes // (cols * itemsize))
                 // sub_mult * sub_mult)
        tr = min(tr, rows)
    else:
        tr = rows
    return rows, cols, tr


def pallas_reshape(x, *shape):
    """Equivalent of Reshape(*shape)(x): x.view(*shape), copy done in Pallas."""
    total = x.size
    out_shape = _resolve_shape(total, shape)

    if total == 0 or total % 128 != 0:
        # TODO(synk): pad-and-strip Pallas path for non-lane-aligned sizes;
        # a metadata-only reshape is strictly faster and exactly equivalent.
        return x.reshape(out_shape)

    itemsize = jnp.dtype(x.dtype).itemsize
    rows, cols, tr = _fold_and_tile(total, itemsize)

    flat2d = x.reshape(rows, cols)

    copied = pl.pallas_call(
        _copy_kernel,
        out_shape=jax.ShapeDtypeStruct((rows, cols), x.dtype),
        grid_spec=pltpu.PrefetchScalarGridSpec(
            num_scalar_prefetch=0,
            grid=(pl.cdiv(rows, tr),),
            in_specs=[pl.BlockSpec((tr, cols), lambda i: (i, 0))],
            out_specs=pl.BlockSpec((tr, cols), lambda i: (i, 0)),
        ),
        input_output_aliases={0: 0},
        cost_estimate=pl.CostEstimate(
            flops=0,
            transcendentals=0,
            bytes_accessed=2 * total * itemsize,
        ),
        compiler_params=pltpu.CompilerParams(
            dimension_semantics=("parallel",),
        ),
    )(flat2d)

    # The actual .view(): pure metadata, plain JAX glue.
    return copied.reshape(out_shape)


if __name__ == "__main__":
    root = jax.random.PRNGKey(0)
    k0, k1, k2, k3 = jax.random.split(root, 4)

    # Primary case (matches the torch module's common usage): NCHW, Reshape(2, -1).
    x = jax.random.normal(k0, (2, 4, 16, 16), dtype=jnp.float32)
    y = pallas_reshape(x, 2, -1)
    jax.block_until_ready(y)
    assert y.shape == (2, 4 * 16 * 16)
    assert y.dtype == x.dtype
    assert bool(jnp.all(y == x.reshape(2, -1)))

    # Larger case exercising the row-tiled, pipelined copy path (grid > 1).
    x2 = jax.random.normal(k1, (8, 64, 32, 32), dtype=jnp.float32)
    y2 = pallas_reshape(x2, 8, 64, -1)
    jax.block_until_ready(y2)
    assert y2.shape == (8, 64, 32 * 32)
    assert bool(jnp.all(y2 == x2.reshape(8, 64, -1)))

    # Odd size (not a multiple of 128) -> metadata-only fallback path.
    x3 = jax.random.normal(k2, (2, 3, 5, 7), dtype=jnp.float32)
    y3 = pallas_reshape(x3, -1, 7)
    jax.block_until_ready(y3)
    assert y3.shape == (30, 7)
    assert bool(jnp.all(y3 == x3.reshape(-1, 7)))

    # bf16 case (packed sublane multiple = 16).
    x4 = jax.random.normal(k3, (2, 16, 16, 16), dtype=jnp.bfloat16)
    y4 = pallas_reshape(x4, 2, -1)
    jax.block_until_ready(y4)
    assert y4.shape == (2, 16 * 16 * 16)
    assert y4.dtype == jnp.bfloat16
    assert bool(jnp.all(y4 == x4.reshape(2, -1)))

    print("KERNEL_OK")
</pallas_src>

<mosaic_0001>
module attributes {stable_mosaic.version = 11 : i64} {
  func.func @_copy_kernel(%arg0: i32, %arg1: memref<8x256xf32, #tpu.memory_space<vmem>>, %arg2: memref<8x256xf32, #tpu.memory_space<vmem>>) attributes {dimension_semantics = [#tpu.dimension_semantics<parallel>], iteration_bounds = array<i64: 1>, scalar_prefetch = 0 : i64, scratch_operands = 0 : i64, tpu.core_type = #tpu.core_type<tc>, window_params = [{transform_indices = @transform_0, window_bounds = array<i64: 8, 256>}, {transform_indices = @transform_1, window_bounds = array<i64: 8, 256>}]} {
    %c0 = arith.constant 0 : index
    %c0_0 = arith.constant 0 : index
    %0 = vector.load %arg1[%c0, %c0_0] : memref<8x256xf32, #tpu.memory_space<vmem>>, vector<8x256xf32>
    %c0_1 = arith.constant 0 : index
    %c0_2 = arith.constant 0 : index
    %1 = vector.load %arg2[%c0_1, %c0_2] : memref<8x256xf32, #tpu.memory_space<vmem>>, vector<8x256xf32>
    tpu.vector_store %arg2[%c0_1, %c0_2], %0 {strides = array<i32>} : memref<8x256xf32, #tpu.memory_space<vmem>>, vector<8x256xf32>,
    return
  }
  func.func @transform_0(%arg0: i32) -> (i32, i32) {
    %c0_i32 = arith.constant 0 : i32
    %c0_i32_0 = arith.constant 0 : i32
    return %arg0, %c0_i32 : i32, i32
  }
  func.func @transform_1(%arg0: i32) -> (i32, i32) {
    %c0_i32 = arith.constant 0 : i32
    %c0_i32_0 = arith.constant 0 : i32
    return %arg0, %c0_i32 : i32, i32
  }
}

</mosaic_0001>

<llo_original>
// kernel: tpu_custom_call.1
$region0: #{tpu_custom_call.1}
  #allocation0 [shape = 'u32[]', space=smem, size = 0x4, offset = 0x4, fixed_abs, tag = 'smem constant byte address 0x4 - core index']
  #allocation1 [shape = 'u32[144,128]{1,0:T(1,128)}', space=vmem, size = 0x12000, scoped, tag = 'internal scratch']
  %s0 = inlined_call_operand.hbm [shape: f32[8,256], index: 0, kind: input, shape index: {}, may-alias: {0,1}]
  %s1 = inlined_call_operand.hbm [shape: f32[8,256], index: 1, kind: output, shape index: {}, may-alias: {0,1}]
  %s2 = sld [smem:[#allocation0]]
  $region18: #{tpu_custom_call.1} parent=0
    _
  %s4 = ssub.s32 1, %s2
  %s5 = scalar_select 0, %s4, %s2
  $region1: #{tpu_custom_call.1} parent=0
    #allocation2 [shape = 'u8[8192]{0}', space=vmem, size = 0x2000, scoped, tag = 'input window, operand 0, single buffered']
    #allocation3 [shape = 's32[1]{0}', space=sflag, size = 0x4, scoped, tag = 'scoped memory for tpu_custom_call.1']
    #allocation4 [shape = 's32[1]{0}', space=sflag, size = 0x4, scoped, tag = 'scoped memory for tpu_custom_call.1']
    #allocation5 [shape = 'u8[8192]{0}', space=vmem, size = 0x2000, scoped, tag = 'output window, operand 0, single buffered']
    %6 = vsyncpa [#allocation3], 0
    %7 = vsyncpa [#allocation4], 0
    // Predicated region
    $region2: #{tpu_custom_call.1} parent=1 // pred_check
      _
    $region3: #{tpu_custom_call.1} parent=1 // pred_check_branch
      %9 = sbr.rel (0) target = $region5
    $region4: #{tpu_custom_call.1} parent=1 // pred_region
      %s11 = ssub.s32 256, 256
      %12 = vsyncadd [#allocation3], %s11
      %s14 = sshll.u32 [#allocation2], 4
      %s15 = int_to_ptr.vmem [resolvable:$true] %s14
      %17 = dma.hbm_to_vmem [thread:$0]  %s0, 256, %s15, [#allocation3]
    $region5: #{tpu_custom_call.1} parent=1 // pred_fallthru
      _
    // Predicated region
    $region6: #{tpu_custom_call.1} parent=1 // pred_check
      _
    $region7: #{tpu_custom_call.1} parent=1 // pred_check_branch
      %19 = sbr.rel (0) target = $region9
    $region8: #{tpu_custom_call.1} parent=1 // pred_region
      %20 = dma.done [#allocation3], 256
    $region9: #{tpu_custom_call.1} parent=1 // pred_fallthru
      _
    %v21 = vld [vmem:[#allocation2] sm:$0xff]
    %v22 = vld [vmem:[#allocation2 + $0x8] sm:$0xff]
    %23 = vst [vmem:[#allocation5] sm:$0xff] %v21
    %24 = vst [vmem:[#allocation5 + $0x8] sm:$0xff] %v22
    // Predicated region
    $region10: #{tpu_custom_call.1} parent=1 // pred_check
      _
    $region11: #{tpu_custom_call.1} parent=1 // pred_check_branch
      %26 = sbr.rel (0) target = $region13
    $region12: #{tpu_custom_call.1} parent=1 // pred_region
      %s28 = ssub.s32 256, 256
      %29 = vsyncadd [#allocation4], %s28
      %s31 = sshll.u32 [#allocation5], 4
      %s32 = int_to_ptr.vmem [resolvable:$true] %s31
      %34 = dma.vmem_to_hbm [thread:$0]  %s32, 256, %s1, [#allocation4]
    $region13: #{tpu_custom_call.1} parent=1 // pred_fallthru
      _
    // Predicated region
    $region14: #{tpu_custom_call.1} parent=1 // pred_check
      _
    $region15: #{tpu_custom_call.1} parent=1 // pred_check_branch
      %36 = sbr.rel (0) target = $region17
    $region16: #{tpu_custom_call.1} parent=1 // pred_region
      %37 = dma.done [#allocation4], 256
    $region17: #{tpu_custom_call.1} parent=1 // pred_fallthru
      _
    %38 = vsyncpa [#allocation3], 1
    %39 = vsyncpa [#allocation4], 1

</llo_original>
